<compile_context>
chip_gen: v7x
topology: tpu7x:2x2x1
jax: 0.10.0
libtpu: 0.0.40
codegen_flags: <defaults>
</compile_context>

<pallas_src>
import functools

import jax
import jax.numpy as jnp
from jax import lax
from jax.experimental import pallas as pl
from jax.experimental.pallas import tpu as pltpu

LANES = 128
MIB = 1024 * 1024


def _round_up(a, b):
    return (a + b - 1) // b * b


def _tpu_tuning():
    """Returns (num_tensorcores, target_step_bytes, buffer_budget, vmem_limit)."""
    gen, cores = 0, 1
    try:
        kind = jax.devices()[0].device_kind.lower().replace(" ", "")
        for g in (7, 6, 5, 4):
            if ("v%d" % g) in kind or ("tpu%d" % g) in kind:
                gen = g
                break
        if gen in (7, 4):
            cores = 2                      # v7x: 2 TCs/chip; v4: megacore
        elif gen == 5 and "lite" not in kind and "5e" not in kind:
            cores = 2                      # v5p megacore
    except Exception:
        pass
    if gen >= 7:     # 64 MiB VMEM/TC, ~3.2 TB/s HBM: bigger steps, tight VMEM.
        return cores, 8 * MIB, 20 * MIB, 40 * MIB
    if gen == 6:     # 128 MiB VMEM, ~1.4 TB/s: big steps, generous limit.
        return cores, 12 * MIB, 40 * MIB, 64 * MIB
    if cores == 2:   # v4 / v5p megacore parts, 128 MiB VMEM.
        return cores, 8 * MIB, 32 * MIB, 64 * MIB
    # v5e / unknown: default scoped VMEM is only 16 MiB -> explicit 32 MiB.
    return cores, 4 * MIB, 14 * MIB, 32 * MIB


def _choose_fold(nc, s, pack):
    """Fold factor G (must divide S) so nc*G fills the sublane pack of a vreg."""
    fill0 = nc / _round_up(nc, pack)
    if s <= 1 or fill0 >= 0.75:
        return 1
    g_needed = -(-pack // nc)              # ceil(pack / nc)
    best, best_fill = 1, fill0
    for g in range(2, min(4 * g_needed, s) + 1):
        if s % g:
            continue
        r = nc * g
        fill = r / _round_up(r, pack)
        if fill > best_fill:
            best, best_fill = g, fill
        if r >= pack and fill >= 0.9:
            break
    return best


def _dice_partial_kernel(x_ref, y_ref, out_ref, *, s_total, s_blocks, acc_w,
                         ragged, unroll, masked_chunks):
    """Accumulates lane-resident per-row partial sums of x*y and (x + y).

    out_ref (per row-block / split) has shape (tr, 2*acc_w) f32:
      [:, 0*acc_w:1*acc_w]  partial sum(x*y)
      [:, 1*acc_w:2*acc_w]  partial sum(x) + sum(y)   (the loss only needs the sum)
    The single cross-lane reduce (tiny) happens in the wrapper epilogue.
    """
    p = pl.program_id(1)              # parallel split of the column axis
    k = pl.program_id(2)              # reduction step within this split

    @pl.when(k == 0)
    def _():
        out_ref[...] = jnp.zeros(out_ref.shape, out_ref.dtype)

    nrows, tile_s = x_ref.shape
    nchunks = tile_s // acc_w
    tile_idx = p * s_blocks + k       # global (unclamped) column-tile index
    base = tile_idx * tile_s          # global column offset of this tile
    zero = jnp.zeros((nrows, acc_w), jnp.float32)

    def accumulate(masked, n_steps):
        # Hoisted out of the chunk loop (broadcast iota is not CSE'd).
        col = (lax.broadcasted_iota(jnp.int32, (nrows, acc_w), 1)
               if masked else None)

        def body(c, carry):
            acc_i, acc_s = carry
            start = pl.multiple_of(c * acc_w, acc_w)
            xc = x_ref[:, pl.ds(start, acc_w)].astype(jnp.float32)
            yc = y_ref[:, pl.ds(start, acc_w)].astype(jnp.float32)
            if masked:
                # limit <= 0 => chunk entirely past the end of the row
                # (ragged tail / phantom tile) => contributes nothing.
                limit = s_total - base - c * acc_w
                valid = col < limit
                xc = jnp.where(valid, xc, 0.0)
                yc = jnp.where(valid, yc, 0.0)
            return acc_i + xc * yc, acc_s + (xc + yc)

        acc_i, acc_s = lax.fori_loop(0, n_steps, body, (zero, zero),
                                     unroll=max(1, min(unroll, n_steps)))
        # Lane-aligned adds into the resident output block.
        out_ref[:, 0 * acc_w:1 * acc_w] += acc_i
        out_ref[:, 1 * acc_w:2 * acc_w] += acc_s

    if ragged:
        # Only the last real tile and phantom tiles need masking; interior
        # tiles (the vast majority of steps) take the mask-free fast path.
        is_tail = base + tile_s > s_total

        @pl.when(is_tail)
        def _():
            accumulate(True, masked_chunks)

        @pl.when(jnp.logical_not(is_tail))
        def _():
            accumulate(False, nchunks)
    else:
        accumulate(False, nchunks)


@functools.partial(jax.jit, static_argnames=("smooth",))
def dice_loss(input_arr, target_arr, smooth=1e-5):
    assert input_arr.shape == target_arr.shape
    NC = input_arr.shape[0] * input_arr.shape[1]
    S = 1
    for d in input_arr.shape[2:]:
        S *= d

    itemsize = jnp.dtype(input_arr.dtype).itemsize
    pack_in = max(8, 32 // itemsize)       # sublanes packed per physical row group
    n_cores, target_step_bytes, buffer_budget, vmem_limit = _tpu_tuning()

    # Fold spatial into rows when NC under-fills the sublane pack.  G divides S
    # so the reshape is metadata-only (no padding pass over HBM).
    G = _choose_fold(NC, S, pack_in)
    R = NC * G                             # rows fed to the kernel
    SC = S // G                            # columns per row
    assert SC + (1 << 24) < (1 << 31), "per-row extent too large for int32 math"

    x = input_arr.reshape(R, SC)
    y = target_arr.reshape(R, SC)

    # Row tiling keeps the f32 accumulators register-resident for large NC.
    tr = R if R <= 64 else 64
    r_blocks = pl.cdiv(R, tr)
    rows_pad_in = _round_up(tr, pack_in)   # physical (sublane-padded) input rows
    rows_pad_acc = _round_up(tr, 8)        # f32 accumulator rows

    # Lane-resident accumulator width: ~4K f32 elements per accumulator.
    acc_w = max(LANES, min(2048, (4096 // rows_pad_acc) // LANES * LANES))

    if SC <= acc_w:
        # Tiny per-row extent: one full-extent block (always a legal BlockSpec).
        acc_w = SC
        tile_s = SC
    else:
        # Column tile per grid step, budgeted with *padded* rows so
        # 2 inputs x 2 pipeline buffers stay inside the per-generation VMEM
        # envelope; never wider than the array so blocks stay in bounds.
        col_bytes = 2 * rows_pad_in * itemsize
        tile_s = target_step_bytes // col_bytes
        tile_s = min(tile_s, buffer_budget // (2 * col_bytes), SC)
        tile_s = max(acc_w, tile_s // acc_w * acc_w)

    num_s_tiles = pl.cdiv(SC, tile_s)
    # Split the reduction across TensorCores only where there is more than one
    # (v7x / megacore); on single-core parts a split only adds phantom tiles.
    s_split = 2 if (n_cores >= 2 and num_s_tiles >= 2) else 1
    s_blocks = pl.cdiv(num_s_tiles, s_split)
    # Masking is compiled in only when the tiles do not exactly cover SC
    # (ragged tail and/or phantom tiles from an uneven split).
    ragged = (s_split * s_blocks * tile_s) != SC
    max_tile = num_s_tiles - 1
    tail_cols = SC - (num_s_tiles - 1) * tile_s
    masked_chunks = max(1, pl.cdiv(tail_cols, acc_w))

    acc_vregs = (rows_pad_acc // 8) * max(1, acc_w // LANES)
    unroll = max(1, min(4, 16 // max(1, acc_vregs)))

    def in_map(r, p, k):
        # Clamp phantom / tail tiles into range; the kernel masks their
        # contribution using the *unclamped* tile index.
        return (r, jnp.minimum(p * s_blocks + k, max_tile))

    kernel = functools.partial(
        _dice_partial_kernel,
        s_total=SC, s_blocks=s_blocks, acc_w=acc_w, ragged=ragged,
        unroll=unroll, masked_chunks=masked_chunks)

    partial_sums = pl.pallas_call(
        kernel,
        out_shape=jax.ShapeDtypeStruct((s_split, R, 2 * acc_w), jnp.float32),
        grid_spec=pltpu.PrefetchScalarGridSpec(
            num_scalar_prefetch=0,
            grid=(r_blocks, s_split, s_blocks),
            in_specs=[
                pl.BlockSpec((tr, tile_s), in_map),
                pl.BlockSpec((tr, tile_s), in_map),
            ],
            out_specs=pl.BlockSpec((None, tr, 2 * acc_w),
                                   lambda r, p, k: (p, r, 0)),
        ),
        compiler_params=pltpu.CompilerParams(
            dimension_semantics=("parallel", "parallel", "arbitrary"),
            vmem_limit_bytes=vmem_limit,
        ),
        cost_estimate=pl.CostEstimate(
            flops=4 * NC * S,
            transcendentals=0,
            bytes_accessed=2 * NC * S * itemsize + s_split * R * 2 * acc_w * 4,
        ),
    )(x, y)

    # Tiny epilogue in plain JAX: combine splits, one cross-lane reduce,
    # regroup folded rows, dice ratio and scalar mean.
    sums = partial_sums.sum(axis=0)                     # (R, 2*acc_w)
    sums = sums.reshape(R, 2, acc_w).sum(axis=-1)       # (R, 2): [inter, x+y]
    sums = sums.reshape(NC, G, 2).sum(axis=1)           # (NC, 2)
    inter, sxy = sums[:, 0], sums[:, 1]
    dice = 2.0 * inter / (sxy + smooth)
    loss = jnp.mean(1.0 - dice)
    return loss.astype(input_arr.dtype)


def _dice_loss_ref(input_arr, target_arr, smooth=1e-5):
    """Pure-JAX reference mirroring the torch forward exactly."""
    inter = jnp.sum(input_arr * target_arr, axis=(2, 3, 4))
    denom = (jnp.sum(input_arr, axis=(2, 3, 4))
             + jnp.sum(target_arr, axis=(2, 3, 4)) + smooth)
    return jnp.mean(1.0 - 2.0 * inter / denom)


if __name__ == "__main__":
    # DiceLoss has no parameters (__init__ defines none).
    key = jax.random.PRNGKey(0)
    k1, k2, k3, k4 = jax.random.split(key, 4)

    # Case 1: small multi-channel volume (NC=8 already fills the sublanes).
    shape1 = (2, 4, 4, 8, 8)
    x1 = jax.random.uniform(k1, shape1, dtype=jnp.float32)           # soft preds
    t1 = (jax.random.uniform(k2, shape1) > 0.5).astype(jnp.float32)  # binary tgt
    out1 = jax.block_until_ready(dice_loss(x1, t1))
    ref1 = _dice_loss_ref(x1, t1)
    assert jnp.allclose(out1, ref1, rtol=1e-5, atol=1e-6), (out1, ref1)

    # Case 2: single-channel volume — exercises the sublane row fold, the
    # multi-tile column reduction and the masked ragged-tail fast/slow split.
    shape2 = (1, 1, 128, 128, 100)
    x2 = jax.random.uniform(k3, shape2, dtype=jnp.float32)
    t2 = (jax.random.uniform(k4, shape2) > 0.5).astype(jnp.float32)
    out2 = jax.block_until_ready(dice_loss(x2, t2))
    ref2 = _dice_loss_ref(x2, t2)
    assert jnp.allclose(out2, ref2, rtol=1e-4, atol=1e-5), (out2, ref2)

    print("KERNEL_OK")
</pallas_src>

<mosaic_0001>
module attributes {stable_mosaic.version = 11 : i64} {
  func.func @_dice_partial_kernel(%arg0: i32, %arg1: i32, %arg2: i32, %arg3: memref<8x256xf32, #tpu.memory_space<vmem>>, %arg4: memref<8x256xf32, #tpu.memory_space<vmem>>, %arg5: memref<1x8x512xf32, #tpu.memory_space<vmem>>) attributes {dimension_semantics = [#tpu.dimension_semantics<parallel>, #tpu.dimension_semantics<parallel>, #tpu.dimension_semantics<arbitrary>], iteration_bounds = array<i64: 1, 1, 1>, scalar_prefetch = 0 : i64, scratch_operands = 0 : i64, tpu.core_type = #tpu.core_type<tc>, window_params = [{transform_indices = @transform_0, window_bounds = array<i64: 8, 256>}, {transform_indices = @transform_1, window_bounds = array<i64: 8, 256>}, {transform_indices = @transform_2, window_bounds = array<i64: 1, 8, 512>}]} {
    %c0_i32 = arith.constant 0 : i32
    %0 = arith.cmpi eq, %arg2, %c0_i32 : i32
    %1 = arith.extui %0 : i1 to i32
    %c0_i32_0 = arith.constant 0 : i32
    %2 = arith.cmpi ne, %1, %c0_i32_0 : i32
    scf.if %2 {
      %cst_14 = arith.constant 0.000000e+00 : f32
      %26 = vector.broadcast %cst_14 : f32 to vector<8x512xf32>
      %c0_15 = arith.constant 0 : index
      %c0_16 = arith.constant 0 : index
      %c0_17 = arith.constant 0 : index
      %27 = vector.load %arg5[%c0_15, %c0_16, %c0_17] : memref<1x8x512xf32, #tpu.memory_space<vmem>>, vector<1x8x512xf32>
      %28 = vector.shape_cast %27 : vector<1x8x512xf32> to vector<8x512xf32>
      %29 = vector.shape_cast %26 : vector<8x512xf32> to vector<1x8x512xf32>
      tpu.vector_store %arg5[%c0_15, %c0_16, %c0_17], %29 {strides = array<i32>} : memref<1x8x512xf32, #tpu.memory_space<vmem>>, vector<1x8x512xf32>,
    } else {
    }
    %cst = arith.constant 0.000000e+00 : f32
    %3 = vector.broadcast %cst : f32 to vector<8x256xf32>
    %c0_i32_1 = arith.constant 0 : i32
    %c256_i32 = arith.constant 256 : i32
    %4 = arith.muli %c0_i32_1, %c256_i32 : i32
    %5 = tpu.assume_multiple %4, 256 : i32
    %c0 = arith.constant 0 : index
    %6 = arith.index_cast %5 : i32 to index
    %7 = vector.load %arg3[%c0, %6] : memref<8x256xf32, #tpu.memory_space<vmem>>, vector<8x256xf32>
    %c0_2 = arith.constant 0 : index
    %8 = arith.index_cast %5 : i32 to index
    %9 = vector.load %arg4[%c0_2, %8] : memref<8x256xf32, #tpu.memory_space<vmem>>, vector<8x256xf32>
    %10 = arith.mulf %7, %9 : vector<8x256xf32>
    %11 = arith.addf %3, %10 : vector<8x256xf32>
    %12 = arith.addf %7, %9 : vector<8x256xf32>
    %13 = arith.addf %3, %12 : vector<8x256xf32>
    %c1_i32 = arith.constant 1 : i32
    %c0_3 = arith.constant 0 : index
    %c0_4 = arith.constant 0 : index
    %c0_5 = arith.constant 0 : index
    %14 = vector.load %arg5[%c0_3, %c0_4, %c0_5] : memref<1x8x512xf32, #tpu.memory_space<vmem>>, vector<1x8x256xf32>
    %15 = vector.shape_cast %14 : vector<1x8x256xf32> to vector<8x256xf32>
    %16 = arith.addf %15, %11 : vector<8x256xf32>
    %c0_6 = arith.constant 0 : index
    %c0_7 = arith.constant 0 : index
    %c0_8 = arith.constant 0 : index
    %17 = vector.load %arg5[%c0_6, %c0_7, %c0_8] : memref<1x8x512xf32, #tpu.memory_space<vmem>>, vector<1x8x256xf32>
    %18 = vector.shape_cast %17 : vector<1x8x256xf32> to vector<8x256xf32>
    %19 = vector.shape_cast %16 : vector<8x256xf32> to vector<1x8x256xf32>
    tpu.vector_store %arg5[%c0_6, %c0_7, %c0_8], %19 {strides = array<i32>} : memref<1x8x512xf32, #tpu.memory_space<vmem>>, vector<1x8x256xf32>,
    %c0_9 = arith.constant 0 : index
    %c0_10 = arith.constant 0 : index
    %c256 = arith.constant 256 : index
    %20 = vector.load %arg5[%c0_9, %c0_10, %c256] : memref<1x8x512xf32, #tpu.memory_space<vmem>>, vector<1x8x256xf32>
    %21 = vector.shape_cast %20 : vector<1x8x256xf32> to vector<8x256xf32>
    %22 = arith.addf %21, %13 : vector<8x256xf32>
    %c0_11 = arith.constant 0 : index
    %c0_12 = arith.constant 0 : index
    %c256_13 = arith.constant 256 : index
    %23 = vector.load %arg5[%c0_11, %c0_12, %c256_13] : memref<1x8x512xf32, #tpu.memory_space<vmem>>, vector<1x8x256xf32>
    %24 = vector.shape_cast %23 : vector<1x8x256xf32> to vector<8x256xf32>
    %25 = vector.shape_cast %22 : vector<8x256xf32> to vector<1x8x256xf32>
    tpu.vector_store %arg5[%c0_11, %c0_12, %c256_13], %25 {strides = array<i32>} : memref<1x8x512xf32, #tpu.memory_space<vmem>>, vector<1x8x256xf32>,
    return
  }
  func.func @transform_0(%arg0: i32, %arg1: i32, %arg2: i32) -> (i32, i32) {
    %c1_i32 = arith.constant 1 : i32
    %0 = arith.muli %arg1, %c1_i32 : i32
    %1 = arith.addi %0, %arg2 : i32
    %c0_i32 = arith.constant 0 : i32
    %2 = arith.minsi %1, %c0_i32 : i32
    %c0_i32_0 = arith.constant 0 : i32
    return %arg0, %2 : i32, i32
  }
  func.func @transform_1(%arg0: i32, %arg1: i32, %arg2: i32) -> (i32, i32) {
    %c1_i32 = arith.constant 1 : i32
    %0 = arith.muli %arg1, %c1_i32 : i32
    %1 = arith.addi %0, %arg2 : i32
    %c0_i32 = arith.constant 0 : i32
    %2 = arith.minsi %1, %c0_i32 : i32
    %c0_i32_0 = arith.constant 0 : i32
    return %arg0, %2 : i32, i32
  }
  func.func @transform_2(%arg0: i32, %arg1: i32, %arg2: i32) -> (i32, i32, i32) {
    %c0_i32 = arith.constant 0 : i32
    %c0_i32_0 = arith.constant 0 : i32
    return %arg1, %arg0, %c0_i32 : i32, i32, i32
  }
}

</mosaic_0001>

<llo_original>
// kernel: dice_loss.1
$region0: #{dice_loss.1}
  #allocation0 [shape = 'u32[]', space=smem, size = 0x4, offset = 0x4, fixed_abs, tag = 'smem constant byte address 0x4 - core index']
  #allocation1 [shape = 'u32[144,128]{1,0:T(1,128)}', space=vmem, size = 0x12000, scoped, tag = 'internal scratch']
  %s0 = inlined_call_operand.vmem [shape: f32[8,256], index: 0, kind: input, shape index: {}]
  %s1 = inlined_call_operand.vmem [shape: f32[8,256], index: 1, kind: input, shape index: {}]
  %s2 = inlined_call_operand.vmem [shape: f32[1,8,512], index: 2, kind: output, shape index: {}]
  %s3 = sld [smem:[#allocation0]]
  $region22: #{dice_loss.1} parent=0
    _
  %s5 = ssub.s32 1, %s3
  %s6 = scalar_select 0, %s5, %s3
  // Predicated region
  $region2: #{dice_loss.1} parent=0 // pred_check
    _
  $region3: #{dice_loss.1} parent=0 // pred_check_branch
    %8 = sbr.rel (0) target = $region5
  $region4: #{dice_loss.1} parent=0 // pred_region
    %s9 = sadd.s32 0, 0
    %p10 = scmp.lt.s32.totalorder %s9, 0
    %s11 = scalar_select %p10, %s9, 0
    %s12 = smul.u32 2, %s11
    %p13 = scmp.lt.s32.totalorder %s12, 1
    %s14 = scalar_select %p13, %s12, 1
    %s15 = smul.addr %s14, 8
    %s16 = scalar_lea.vmem %s0, %s15
    %s17 = sadd.s32 0, 0
    %p18 = scmp.lt.s32.totalorder %s17, 0
    %s19 = scalar_select %p18, %s17, 0
    %s20 = smul.u32 2, %s19
  $region5: #{dice_loss.1} parent=0 // pred_fallthru
    _
  // Predicated region
  $region6: #{dice_loss.1} parent=0 // pred_check
    _
  $region7: #{dice_loss.1} parent=0 // pred_check_branch
    %22 = sbr.rel (0) target = $region9
  $region8: #{dice_loss.1} parent=0 // pred_region
    %s23 = sadd.s32 0, 0
    %p24 = scmp.lt.s32.totalorder %s23, 0
    %s25 = scalar_select %p24, %s23, 0
    %s26 = smul.u32 2, %s25
    %p27 = scmp.lt.s32.totalorder %s26, 1
    %s28 = scalar_select %p27, %s26, 1
    %s29 = smul.addr %s28, 8
    %s30 = scalar_lea.vmem %s1, %s29
    %s31 = sadd.s32 0, 0
    %p32 = scmp.lt.s32.totalorder %s31, 0
    %s33 = scalar_select %p32, %s31, 0
    %s34 = smul.u32 2, %s33
  $region9: #{dice_loss.1} parent=0 // pred_fallthru
    _
  %s35 = sadd.s32 0, 0
  %p36 = scmp.lt.s32.totalorder %s35, 0
  %s37 = scalar_select %p36, %s35, 0
  %s38 = smul.u32 2, %s37
  %p39 = scmp.lt.s32.totalorder %s38, 1
  %s40 = scalar_select %p39, %s38, 1
  %s41 = smul.addr %s40, 8
  %s42 = scalar_lea.vmem %s0, %s41
  %s43 = sadd.s32 0, 0
  %p44 = scmp.lt.s32.totalorder %s43, 0
  %s45 = scalar_select %p44, %s43, 0
  %s46 = smul.u32 2, %s45
  %p47 = scmp.lt.s32.totalorder %s46, 1
  %s48 = scalar_select %p47, %s46, 1
  %s49 = smul.addr %s48, 8
  %s50 = scalar_lea.vmem %s1, %s49
  %s51 = sadd.s32 0, 0
  %p52 = scmp.lt.s32.totalorder %s51, 0
  %s53 = scalar_select %p52, %s51, 0
  %s54 = smul.u32 2, %s53
  %p55 = scmp.lt.s32.totalorder %s54, 1
  %s56 = scalar_select %p55, %s54, 1
  %s57 = smul.addr %s56, 8
  %s58 = scalar_lea.vmem %s0, %s57
  %s59 = sadd.s32 0, 0
  %p60 = scmp.lt.s32.totalorder %s59, 0
  %s61 = scalar_select %p60, %s59, 0
  %s62 = smul.u32 2, %s61
  %s63 = sadd.s32 0, 0
  %p64 = scmp.lt.s32.totalorder %s63, 0
  %s65 = scalar_select %p64, %s63, 0
  %s66 = smul.u32 2, %s65
  %p67 = scmp.lt.s32.totalorder %s66, 1
  %s68 = scalar_select %p67, %s66, 1
  %s69 = smul.addr %s68, 8
  %s70 = scalar_lea.vmem %s1, %s69
  %s71 = sadd.s32 0, 0
  %p72 = scmp.lt.s32.totalorder %s71, 0
  %s73 = scalar_select %p72, %s71, 0
  %s74 = smul.u32 2, %s73
  %p75 = scmp.eq.s32.totalorder 0, 0
  // Predicated region
  $region10: #{dice_loss.1} parent=0 // pred_check
    %p76 = pneg %p75
  $region11: #{dice_loss.1} parent=0 // pred_check_branch
    %78 = sbr.rel (%p76) target = $region13
  $region12: #{dice_loss.1} parent=0 // pred_region
    %79 = vst [vmem:[%s2] sm:$0xff] 0.0
    %80 = vst [vmem:[%s2 + $0x8] sm:$0xff] 0.0
    %81 = vst [vmem:[%s2 + $0x10] sm:$0xff] 0.0
    %82 = vst [vmem:[%s2 + $0x18] sm:$0xff] 0.0
  $region13: #{dice_loss.1} parent=0 // pred_fallthru
    _
  %v83 = vld [vmem:[%s58] sm:$0xff]
  %v84 = vld [vmem:[%s58 + $0x8] sm:$0xff]
  %v85 = vld [vmem:[%s70] sm:$0xff]
  %v86 = vld [vmem:[%s70 + $0x8] sm:$0xff]
  %v87 = vmul.f32 %v83, %v85
  %v88 = vmul.f32 %v84, %v86
  %v89 = vadd.f32 %v87, 0.0
  %v90 = vadd.f32 %v88, 0.0
  %v91 = vadd.f32 %v83, %v85
  %v92 = vadd.f32 %v84, %v86
  %v93 = vadd.f32 %v91, 0.0
  %v94 = vadd.f32 %v92, 0.0
  %v95 = vld [vmem:[%s2] sm:$0xff]
  %v96 = vld [vmem:[%s2 + $0x8] sm:$0xff]
  %v97 = vadd.f32 %v95, %v89
  %v98 = vadd.f32 %v96, %v90
  %99 = vst [vmem:[%s2] sm:$0xff] %v97
  %100 = vst [vmem:[%s2 + $0x8] sm:$0xff] %v98
  %v101 = vld [vmem:[%s2 + $0x10] sm:$0xff]
  %v102 = vld [vmem:[%s2 + $0x18] sm:$0xff]
  %v103 = vadd.f32 %v101, %v93
  %v104 = vadd.f32 %v102, %v94
  %105 = vst [vmem:[%s2 + $0x10] sm:$0xff] %v103
  %106 = vst [vmem:[%s2 + $0x18] sm:$0xff] %v104
  // Predicated region
  $region14: #{dice_loss.1} parent=0 // pred_check
    _
  $region15: #{dice_loss.1} parent=0 // pred_check_branch
    %108 = sbr.rel (0) target = $region17
  $region16: #{dice_loss.1} parent=0 // pred_region
    _
  $region17: #{dice_loss.1} parent=0 // pred_fallthru
    _
  // Predicated region
  $region18: #{dice_loss.1} parent=0 // pred_check
    _
  $region19: #{dice_loss.1} parent=0 // pred_check_branch
    %110 = sbr.rel (0) target = $region21
  $region20: #{dice_loss.1} parent=0 // pred_region
    _
  $region21: #{dice_loss.1} parent=0 // pred_fallthru
    _

</llo_original>
